<compile_context>
chip_gen: v6e
topology: v6e:2x2x1
jax: 0.10.0
libtpu: 0.0.40
codegen_flags: <defaults>
</compile_context>

<pallas_src>
import functools

import jax
import jax.numpy as jnp
from jax.experimental import pallas as pl
from jax.experimental.pallas import tpu as pltpu

LANE = 128
SUBLANE = 8


def _round_up(x, m):
    return ((x + m - 1) // m) * m


def _cdiv(a, b):
    return (a + b - 1) // b


def _pad2d(a, rows, cols):
    """Zero-pad a 2-D array up to (rows, cols)."""
    r, c = a.shape
    if r == rows and c == cols:
        return a
    return jnp.zeros((rows, cols), a.dtype).at[:r, :c].set(a)


def actor_forward_kernel(x_ref, w1_ref, b1_ref, w2_ref, b2_ref, w3_ref, b3_ref,
                         pi_ref, *, compute_dtype):
    """Fused 3-layer MLP + exact softmax over the (narrow) action dim."""
    # In-kernel cast: no-op for f32, cheap VPU op hidden under the matmul for bf16.
    x = x_ref[...].astype(compute_dtype)

    # fc1 + ReLU (padded w1/b1 columns are zero -> padded hidden cols stay exactly 0)
    h1 = jnp.dot(x, w1_ref[...], preferred_element_type=jnp.float32) + b1_ref[...]
    h1 = jnp.maximum(h1, 0.0).astype(compute_dtype)

    # fc2 + ReLU
    h2 = jnp.dot(h1, w2_ref[...], preferred_element_type=jnp.float32) + b2_ref[...]
    h2 = jnp.maximum(h2, 0.0).astype(compute_dtype)

    # pi head: logits are only n_actions wide -> no lane masking needed.
    logits = jnp.dot(h2, w3_ref[...], preferred_element_type=jnp.float32) + b3_ref[...]

    # Numerically-stable softmax with EXACT normalisation (rows must sum to 1 to
    # f32 precision; downstream Categorical log-probs / PPO ratios depend on it).
    m = jnp.max(logits, axis=1, keepdims=True)
    e = jnp.exp(logits - m)
    denom = jnp.sum(e, axis=1, keepdims=True)
    pi_ref[...] = (e / denom).astype(pi_ref.dtype)


def actor_forward(state, params, *, block_b=None, use_bf16=False):
    """ActorNetwork forward pass via a single fused Pallas kernel.

    state : (B, input_dims) float32
    params: dict with w1 (in,f1), b1 (1,f1), w2 (f1,f2), b2 (1,f2),
            w3 (f2,A), b3 (1,A)  -- weights stored as (in_features, out_features).
    """
    B, input_dims = state.shape
    f1 = params["w1"].shape[1]
    f2 = params["w2"].shape[1]
    n_actions = params["w3"].shape[1]

    # Only the VMEM-resident hidden dims are lane-padded; the streamed state and
    # output keep their real (full-extent) feature widths.
    f1_p = _round_up(f1, LANE)
    f2_p = _round_up(f2, LANE)

    w_dtype = jnp.bfloat16 if use_bf16 else jnp.float32
    compute_dtype = jnp.bfloat16 if use_bf16 else jnp.float32

    w1 = _pad2d(params["w1"], input_dims, f1_p).astype(w_dtype)
    b1 = _pad2d(params["b1"], 1, f1_p).astype(jnp.float32)
    w2 = _pad2d(params["w2"], f1_p, f2_p).astype(w_dtype)
    b2 = _pad2d(params["b2"], 1, f2_p).astype(jnp.float32)
    w3 = _pad2d(params["w3"], f2_p, n_actions).astype(w_dtype)
    b3 = params["b3"].astype(jnp.float32)                       # (1, n_actions)

    # --- batch tiling ---------------------------------------------------------
    if block_b is None:
        if B <= 2048:
            block_b = _round_up(B, SUBLANE)          # single tile
        else:
            steps = _cdiv(B, 2048)
            steps += steps % 2                        # even step count (v7x: 2 TCs)
            block_b = _round_up(_cdiv(B, steps), SUBLANE)
    block_b = max(SUBLANE, _round_up(block_b, SUBLANE))
    b_pad = _round_up(B, block_b)

    # Pad batch rows only (no lane padding, no dtype cast of the streamed state).
    x = _pad2d(state, b_pad, input_dims)
    grid = (b_pad // block_b,)

    # --- generation-aware VMEM budget ----------------------------------------
    x_bytes = 4
    w_bytes = 2 if use_bf16 else 4
    step_bytes = (
        2 * block_b * input_dims * x_bytes                                  # state tile (dbl-buf)
        + 2 * block_b * n_actions * 4                                       # output tile (dbl-buf)
        + 2 * (input_dims * f1_p + f1_p * f2_p + f2_p * n_actions) * w_bytes  # weights
        + 2 * (f1_p + f2_p + n_actions) * 4                                 # biases
        + 3 * block_b * max(f1_p, f2_p) * 4                                 # f32 intermediates
    )
    vmem_limit = int(min(max(2 * step_bytes, 16 << 20), 64 << 20))

    # --- scheduling hint ------------------------------------------------------
    weight_bytes = (input_dims * f1_p + f1_p * f2_p + f2_p * n_actions) * w_bytes
    cost = pl.CostEstimate(
        flops=2 * b_pad * (input_dims * f1_p + f1_p * f2_p + f2_p * n_actions),
        transcendentals=b_pad * n_actions,
        bytes_accessed=(b_pad * input_dims * x_bytes + weight_bytes
                        + (f1_p + f2_p + n_actions) * 4 + b_pad * n_actions * 4),
    )

    kernel = functools.partial(actor_forward_kernel, compute_dtype=compute_dtype)

    pi_padded = pl.pallas_call(
        kernel,
        out_shape=jax.ShapeDtypeStruct((b_pad, n_actions), jnp.float32),
        grid_spec=pltpu.PrefetchScalarGridSpec(
            num_scalar_prefetch=0,
            grid=grid,
            in_specs=[
                # per-batch-tile of the state; full-extent (unpadded) feature dim
                pl.BlockSpec((block_b, input_dims), lambda i: (i, 0)),
                # weights / biases: full (padded) arrays, resident across the grid
                pl.BlockSpec((input_dims, f1_p), lambda i: (0, 0)),
                pl.BlockSpec((1, f1_p), lambda i: (0, 0)),
                pl.BlockSpec((f1_p, f2_p), lambda i: (0, 0)),
                pl.BlockSpec((1, f2_p), lambda i: (0, 0)),
                pl.BlockSpec((f2_p, n_actions), lambda i: (0, 0)),
                pl.BlockSpec((1, n_actions), lambda i: (0, 0)),
            ],
            out_specs=pl.BlockSpec((block_b, n_actions), lambda i: (i, 0)),
        ),
        compiler_params=pltpu.CompilerParams(
            dimension_semantics=("parallel",),
            vmem_limit_bytes=vmem_limit),
        cost_estimate=cost,
    )(x, w1, b1, w2, b2, w3, b3)

    return pi_padded[:B] if b_pad != B else pi_padded


def init_actor_params(key, input_dims, fc1_dims, fc2_dims, n_actions):
    """Deterministic init mimicking nn.Linear's U(-1/sqrt(fan_in), 1/sqrt(fan_in)).

    Weights are stored as (in_features, out_features) — already transposed relative
    to PyTorch's (out, in) — so the kernel computes x @ W directly.
    """
    keys = jax.random.split(key, 6)

    def linear(kw, kb, fan_in, fan_out):
        bound = 1.0 / jnp.sqrt(jnp.float32(fan_in))
        w = jax.random.uniform(kw, (fan_in, fan_out), jnp.float32, -bound, bound)
        b = jax.random.uniform(kb, (1, fan_out), jnp.float32, -bound, bound)
        return w, b

    w1, b1 = linear(keys[0], keys[1], input_dims, fc1_dims)
    w2, b2 = linear(keys[2], keys[3], fc1_dims, fc2_dims)
    w3, b3 = linear(keys[4], keys[5], fc2_dims, n_actions)
    return {"w1": w1, "b1": b1, "w2": w2, "b2": b2, "w3": w3, "b3": b3}


def actor_forward_ref(state, p):
    """Pure-JAX reference for correctness checking."""
    h1 = jax.nn.relu(state @ p["w1"] + p["b1"])
    h2 = jax.nn.relu(h1 @ p["w2"] + p["b2"])
    return jax.nn.softmax(h2 @ p["w3"] + p["b3"], axis=1)


if __name__ == "__main__":
    # Small shapes consistent with an RL actor MLP.
    batch = 8
    input_dims = 32
    fc1_dims = 64
    fc2_dims = 64
    n_actions = 8

    key = jax.random.PRNGKey(0)
    k_params, k_state, k_big = jax.random.split(key, 3)

    params = init_actor_params(k_params, input_dims, fc1_dims, fc2_dims, n_actions)
    state = jax.random.normal(k_state, (batch, input_dims), jnp.float32)

    # --- small batch, single grid step (f32 path) ---
    pi = jax.block_until_ready(actor_forward(state, params))
    pi_ref = actor_forward_ref(state, params)
    assert pi.shape == (batch, n_actions)
    assert bool(jnp.all(jnp.abs(jnp.sum(pi, axis=1) - 1.0) < 1e-5))       # exact softmax
    assert jnp.allclose(pi, pi_ref, atol=2e-3, rtol=2e-3)

    # --- large batch: auto block_b -> even multi-step grid + batch-row tail padding ---
    big_state = jax.random.normal(k_big, (2060, input_dims), jnp.float32)
    pi_big = jax.block_until_ready(actor_forward(big_state, params))
    pi_big_ref = actor_forward_ref(big_state, params)
    assert pi_big.shape == (2060, n_actions)
    assert bool(jnp.all(jnp.abs(jnp.sum(pi_big, axis=1) - 1.0) < 1e-5))
    assert jnp.allclose(pi_big, pi_big_ref, atol=2e-3, rtol=2e-3)

    # --- bf16 weight/activation path (f32 accumulation, exact normalisation) ---
    pi_bf16 = jax.block_until_ready(actor_forward(state, params, use_bf16=True))
    assert pi_bf16.shape == (batch, n_actions)
    assert bool(jnp.all(jnp.abs(jnp.sum(pi_bf16, axis=1) - 1.0) < 1e-5))
    assert jnp.allclose(pi_bf16, pi_ref, atol=5e-2, rtol=5e-2)

    # TODO(synk): sample_action / evaluate_actions (Categorical sampling, entropy) and
    # optimizer / checkpoint I/O are host/JAX-level concerns, not part of this kernel.
    print("KERNEL_OK")
</pallas_src>

<mosaic_0001>
module attributes {stable_mosaic.version = 11 : i64} {
  func.func @actor_forward_kernel(%arg0: i32, %arg1: memref<8x32xf32, #tpu.memory_space<vmem>>, %arg2: memref<32x128xf32, #tpu.memory_space<vmem>>, %arg3: memref<1x128xf32, #tpu.memory_space<vmem>>, %arg4: memref<128x128xf32, #tpu.memory_space<vmem>>, %arg5: memref<1x128xf32, #tpu.memory_space<vmem>>, %arg6: memref<128x8xf32, #tpu.memory_space<vmem>>, %arg7: memref<1x8xf32, #tpu.memory_space<vmem>>, %arg8: memref<8x8xf32, #tpu.memory_space<vmem>>) attributes {dimension_semantics = [#tpu.dimension_semantics<parallel>], iteration_bounds = array<i64: 1>, scalar_prefetch = 0 : i64, scratch_operands = 0 : i64, tpu.core_type = #tpu.core_type<tc>, window_params = [{transform_indices = @transform_0, window_bounds = array<i64: 8, 32>}, {pipeline_mode = #tpu.pipeline_mode<synchronous>, transform_indices = @transform_1, window_bounds = array<i64: 32, 128>}, {pipeline_mode = #tpu.pipeline_mode<synchronous>, transform_indices = @transform_2, window_bounds = array<i64: 1, 128>}, {pipeline_mode = #tpu.pipeline_mode<synchronous>, transform_indices = @transform_3, window_bounds = array<i64: 128, 128>}, {pipeline_mode = #tpu.pipeline_mode<synchronous>, transform_indices = @transform_4, window_bounds = array<i64: 1, 128>}, {pipeline_mode = #tpu.pipeline_mode<synchronous>, transform_indices = @transform_5, window_bounds = array<i64: 128, 8>}, {pipeline_mode = #tpu.pipeline_mode<synchronous>, transform_indices = @transform_6, window_bounds = array<i64: 1, 8>}, {transform_indices = @transform_7, window_bounds = array<i64: 8, 8>}]} {
    %c0 = arith.constant 0 : index
    %c0_0 = arith.constant 0 : index
    %0 = vector.load %arg1[%c0, %c0_0] : memref<8x32xf32, #tpu.memory_space<vmem>>, vector<8x32xf32>
    %c0_1 = arith.constant 0 : index
    %c0_2 = arith.constant 0 : index
    %1 = vector.load %arg2[%c0_1, %c0_2] : memref<32x128xf32, #tpu.memory_space<vmem>>, vector<32x128xf32>
    %cst = arith.constant dense<0.000000e+00> : vector<8x128xf32>
    %2 = tpu.matmul %0, %1, %cst {dimension_numbers = #tpu.dot_dimension_numbers<[1], [0], [0], [1], [0, 0, 1, 1], [], []>} : vector<8x32xf32>, vector<32x128xf32>, vector<8x128xf32> -> vector<8x128xf32>
    %c0_3 = arith.constant 0 : index
    %c0_4 = arith.constant 0 : index
    %3 = vector.load %arg3[%c0_3, %c0_4] : memref<1x128xf32, #tpu.memory_space<vmem>>, vector<1x128xf32>
    %4 = vector.broadcast %3 : vector<1x128xf32> to vector<8x128xf32>
    %5 = arith.addf %2, %4 : vector<8x128xf32>
    %cst_5 = arith.constant 0.000000e+00 : f32
    %6 = vector.broadcast %cst_5 : f32 to vector<8x128xf32>
    %7 = arith.maximumf %5, %6 : vector<8x128xf32>
    %c0_6 = arith.constant 0 : index
    %c0_7 = arith.constant 0 : index
    %8 = vector.load %arg4[%c0_6, %c0_7] : memref<128x128xf32, #tpu.memory_space<vmem>>, vector<128x128xf32>
    %cst_8 = arith.constant dense<0.000000e+00> : vector<8x128xf32>
    %9 = tpu.matmul %7, %8, %cst_8 {dimension_numbers = #tpu.dot_dimension_numbers<[1], [0], [0], [1], [0, 0, 1, 1], [], []>} : vector<8x128xf32>, vector<128x128xf32>, vector<8x128xf32> -> vector<8x128xf32>
    %c0_9 = arith.constant 0 : index
    %c0_10 = arith.constant 0 : index
    %10 = vector.load %arg5[%c0_9, %c0_10] : memref<1x128xf32, #tpu.memory_space<vmem>>, vector<1x128xf32>
    %11 = vector.broadcast %10 : vector<1x128xf32> to vector<8x128xf32>
    %12 = arith.addf %9, %11 : vector<8x128xf32>
    %cst_11 = arith.constant 0.000000e+00 : f32
    %13 = vector.broadcast %cst_11 : f32 to vector<8x128xf32>
    %14 = arith.maximumf %12, %13 : vector<8x128xf32>
    %c0_12 = arith.constant 0 : index
    %c0_13 = arith.constant 0 : index
    %15 = vector.load %arg6[%c0_12, %c0_13] : memref<128x8xf32, #tpu.memory_space<vmem>>, vector<128x8xf32>
    %cst_14 = arith.constant dense<0.000000e+00> : vector<8x8xf32>
    %16 = tpu.matmul %14, %15, %cst_14 {dimension_numbers = #tpu.dot_dimension_numbers<[1], [0], [0], [1], [0, 0, 1, 1], [], []>} : vector<8x128xf32>, vector<128x8xf32>, vector<8x8xf32> -> vector<8x8xf32>
    %c0_15 = arith.constant 0 : index
    %c0_16 = arith.constant 0 : index
    %17 = vector.load %arg7[%c0_15, %c0_16] : memref<1x8xf32, #tpu.memory_space<vmem>>, vector<1x8xf32>
    %18 = vector.broadcast %17 : vector<1x8xf32> to vector<8x8xf32>
    %19 = arith.addf %16, %18 : vector<8x8xf32>
    %cst_17 = arith.constant dense<0xFF800000> : vector<8xf32>
    %20 = vector.multi_reduction <maximumf>, %19, %cst_17 [1] : vector<8x8xf32> to vector<8xf32>
    %21 = vector.shape_cast %20 : vector<8xf32> to vector<8x1xf32>
    %22 = vector.broadcast %21 : vector<8x1xf32> to vector<8x8xf32>
    %23 = arith.subf %19, %22 : vector<8x8xf32>
    %24 = math.exp %23 : vector<8x8xf32>
    %cst_18 = arith.constant dense<0.000000e+00> : vector<8xf32>
    %25 = vector.multi_reduction <add>, %24, %cst_18 [1] : vector<8x8xf32> to vector<8xf32>
    %26 = vector.shape_cast %25 : vector<8xf32> to vector<8x1xf32>
    %27 = vector.broadcast %26 : vector<8x1xf32> to vector<8x8xf32>
    %28 = arith.divf %24, %27 : vector<8x8xf32>
    %c0_19 = arith.constant 0 : index
    %c0_20 = arith.constant 0 : index
    %29 = vector.load %arg8[%c0_19, %c0_20] : memref<8x8xf32, #tpu.memory_space<vmem>>, vector<8x8xf32>
    tpu.vector_store %arg8[%c0_19, %c0_20], %28 {strides = array<i32>} : memref<8x8xf32, #tpu.memory_space<vmem>>, vector<8x8xf32>,
    return
  }
  func.func @transform_0(%arg0: i32) -> (i32, i32) {
    %c0_i32 = arith.constant 0 : i32
    %c0_i32_0 = arith.constant 0 : i32
    return %arg0, %c0_i32 : i32, i32
  }
  func.func @transform_1(%arg0: i32) -> (i32, i32) {
    %c0_i32 = arith.constant 0 : i32
    %c0_i32_0 = arith.constant 0 : i32
    %c0_i32_1 = arith.constant 0 : i32
    return %c0_i32, %c0_i32_0 : i32, i32
  }
  func.func @transform_2(%arg0: i32) -> (i32, i32) {
    %c0_i32 = arith.constant 0 : i32
    %c0_i32_0 = arith.constant 0 : i32
    %c0_i32_1 = arith.constant 0 : i32
    return %c0_i32, %c0_i32_0 : i32, i32
  }
  func.func @transform_3(%arg0: i32) -> (i32, i32) {
    %c0_i32 = arith.constant 0 : i32
    %c0_i32_0 = arith.constant 0 : i32
    %c0_i32_1 = arith.constant 0 : i32
    return %c0_i32, %c0_i32_0 : i32, i32
  }
  func.func @transform_4(%arg0: i32) -> (i32, i32) {
    %c0_i32 = arith.constant 0 : i32
    %c0_i32_0 = arith.constant 0 : i32
    %c0_i32_1 = arith.constant 0 : i32
    return %c0_i32, %c0_i32_0 : i32, i32
  }
  func.func @transform_5(%arg0: i32) -> (i32, i32) {
    %c0_i32 = arith.constant 0 : i32
    %c0_i32_0 = arith.constant 0 : i32
    %c0_i32_1 = arith.constant 0 : i32
    return %c0_i32, %c0_i32_0 : i32, i32
  }
  func.func @transform_6(%arg0: i32) -> (i32, i32) {
    %c0_i32 = arith.constant 0 : i32
    %c0_i32_0 = arith.constant 0 : i32
    %c0_i32_1 = arith.constant 0 : i32
    return %c0_i32, %c0_i32_0 : i32, i32
  }
  func.func @transform_7(%arg0: i32) -> (i32, i32) {
    %c0_i32 = arith.constant 0 : i32
    %c0_i32_0 = arith.constant 0 : i32
    return %arg0, %c0_i32 : i32, i32
  }
}

</mosaic_0001>

<llo_original>
// kernel: tpu_custom_call.1
$region0: #{tpu_custom_call.1}
  #allocation0 [shape = 'u32[]', space=smem, size = 0x4, offset = 0x4, fixed_abs, tag = 'smem constant byte address 0x4 - core index']
  #allocation1 [shape = 'u32[144,128]{1,0:T(1,128)}', space=vmem, size = 0x12000, scoped, tag = 'internal scratch']
  %s0 = inlined_call_operand.vmem [shape: f32[8,32], index: 0, kind: input, shape index: {}]
  %s1 = inlined_call_operand.hbm [shape: f32[32,128], index: 1, kind: input, shape index: {}]
  %s2 = inlined_call_operand.vmem [shape: f32[1,128], index: 2, kind: input, shape index: {}]
  %s3 = inlined_call_operand.vmem [shape: f32[128,128], index: 3, kind: input, shape index: {}]
  %s4 = inlined_call_operand.hbm [shape: f32[1,128], index: 4, kind: input, shape index: {}]
  %s5 = inlined_call_operand.vmem [shape: f32[128,8], index: 5, kind: input, shape index: {}]
  %s6 = inlined_call_operand.vmem [shape: f32[1,8], index: 6, kind: input, shape index: {}]
  %s7 = inlined_call_operand.hbm [shape: f32[8,8], index: 7, kind: output, shape index: {}]
  %s8 = sld [smem:[#allocation0]]
  $region46: #{tpu_custom_call.1} parent=0
    _
  %s10 = ssub.s32 1, %s8
  %s11 = scalar_select 0, %s10, %s8
  $region1: #{tpu_custom_call.1} parent=0
    #allocation2 [shape = 'u8[16384]{0}', space=vmem, size = 0x4000, scoped, tag = 'input window, operand 1, single buffered']
    #allocation3 [shape = 's32[1]{0}', space=sflag, size = 0x4, scoped, tag = 'scoped memory for tpu_custom_call.1']
    #allocation4 [shape = 's32[1]{0}', space=sflag, size = 0x4, scoped, tag = 'scoped memory for tpu_custom_call.1']
    #allocation5 [shape = 'u8[512]{0}', space=vmem, size = 0x400, scoped, tag = 'input window, operand 4, single buffered']
    #allocation6 [shape = 's32[1]{0}', space=sflag, size = 0x4, scoped, tag = 'scoped memory for tpu_custom_call.1']
    #allocation7 [shape = 'u8[4096]{0}', space=vmem, size = 0x1000, scoped, tag = 'output window, operand 0, single buffered']
    %12 = vsyncpa [#allocation3], 0
    %13 = vsyncpa [#allocation6], 0
    %14 = vsyncpa [#allocation4], 0
    // Predicated region
    $region2: #{tpu_custom_call.1} parent=1 // pred_check
      _
    $region3: #{tpu_custom_call.1} parent=1 // pred_check_branch
      %16 = sbr.rel (0) target = $region5
    $region4: #{tpu_custom_call.1} parent=1 // pred_region
      _
    $region5: #{tpu_custom_call.1} parent=1 // pred_fallthru
      _
    // Predicated region
    $region6: #{tpu_custom_call.1} parent=1 // pred_check
      _
    $region7: #{tpu_custom_call.1} parent=1 // pred_check_branch
      %18 = sbr.rel (0) target = $region9
    $region8: #{tpu_custom_call.1} parent=1 // pred_region
      %s20 = ssub.s32 512, 512
      %21 = vsyncadd [#allocation3], %s20
      %s22 = sshll.u32 [#allocation2], 4
      %s23 = int_to_ptr.vmem [resolvable:$true] %s22
      %28 = dma.hbm_to_vmem [thread:$0]  %s1, 512, %s23, [#allocation3], 128, 128, 8
    $region9: #{tpu_custom_call.1} parent=1 // pred_fallthru
      _
    // Predicated region
    $region10: #{tpu_custom_call.1} parent=1 // pred_check
      _
    $region11: #{tpu_custom_call.1} parent=1 // pred_check_branch
      %30 = sbr.rel (0) target = $region13
    $region12: #{tpu_custom_call.1} parent=1 // pred_region
      _
    $region13: #{tpu_custom_call.1} parent=1 // pred_fallthru
      _
    // Predicated region
    $region14: #{tpu_custom_call.1} parent=1 // pred_check
      _
    $region15: #{tpu_custom_call.1} parent=1 // pred_check_branch
      %32 = sbr.rel (0) target = $region17
    $region16: #{tpu_custom_call.1} parent=1 // pred_region
      _
    $region17: #{tpu_custom_call.1} parent=1 // pred_fallthru
      _
    // Predicated region
    $region18: #{tpu_custom_call.1} parent=1 // pred_check
      _
    $region19: #{tpu_custom_call.1} parent=1 // pred_check_branch
      %34 = sbr.rel (0) target = $region21
    $region20: #{tpu_custom_call.1} parent=1 // pred_region
      %s36 = ssub.s32 16, 16
      %37 = vsyncadd [#allocation6], %s36
      %s39 = sshll.u32 [#allocation5], 4
      %s40 = int_to_ptr.vmem [resolvable:$true] %s39
      %42 = dma.hbm_to_vmem [thread:$0]  %s4, 16, %s40, [#allocation6]
    $region21: #{tpu_custom_call.1} parent=1 // pred_fallthru
      _
    // Predicated region
    $region22: #{tpu_custom_call.1} parent=1 // pred_check
      _
    $region23: #{tpu_custom_call.1} parent=1 // pred_check_branch
      %44 = sbr.rel (0) target = $region25
    $region24: #{tpu_custom_call.1} parent=1 // pred_region
      _
    $region25: #{tpu_custom_call.1} parent=1 // pred_fallthru
      _
    // Predicated region
    $region26: #{tpu_custom_call.1} parent=1 // pred_check
      _
    $region27: #{tpu_custom_call.1} parent=1 // pred_check_branch
      %46 = sbr.rel (0) target = $region29
    $region28: #{tpu_custom_call.1} parent=1 // pred_region
      _
    $region29: #{tpu_custom_call.1} parent=1 // pred_fallthru
      _
    // Predicated region
    $region30: #{tpu_custom_call.1} parent=1 // pred_check
      _
    $region31: #{tpu_custom_call.1} parent=1 // pred_check_branch
      %48 = sbr.rel (0) target = $region33
    $region32: #{tpu_custom_call.1} parent=1 // pred_region
      %49 = dma.done [#allocation3], 512
    $region33: #{tpu_custom_call.1} parent=1 // pred_fallthru
      _
    // Predicated region
    $region34: #{tpu_custom_call.1} parent=1 // pred_check
      _
    $region35: #{tpu_custom_call.1} parent=1 // pred_check_branch
      %51 = sbr.rel (0) target = $region37
    $region36: #{tpu_custom_call.1} parent=1 // pred_region
      %52 = dma.done [#allocation6], 16
    $region37: #{tpu_custom_call.1} parent=1 // pred_fallthru
      _
    %v53 = vld [vmem:[%s0] sm:$0xff]
    %v54 = vld [vmem:[#allocation2] sm:$0xff]
    %v55 = vld [vmem:[#allocation2 + $0x8] sm:$0xff]
    %v56 = vld [vmem:[#allocation2 + $0x10] sm:$0xff]
    %v57 = vld [vmem:[#allocation2 + $0x18] sm:$0xff]
    %v58 = vld [vmem:[%s2] sm:$0x1]
    %v60 = vlaneseq
    %v61 = vshrl.u32 %v60, 7
    %v62 = vsub.s32 0, %v61
    %v63 = vrot.slane %v58, %v62
    %vm65 = vcmask 261120
    %v67 = vsel %vm65, %v53, 0
    %69 = vmatprep.subr.mxu0 0.0
    %70 = vmatpush1.msra.mxu0 0.0
    %71 = vmatprep.subr.mxu0 0.0
    %72 = vmatpush1.msra.mxu0 0.0
    %73 = vmatprep.subr.mxu0 0.0
    %74 = vmatpush1.msra.mxu0 0.0
    %75 = vmatprep.subr.mxu0 0.0
    %76 = vmatpush1.msra.mxu0 0.0
    %77 = vmatprep.subr.mxu0 0.0
    %78 = vmatpush1.msra.mxu0 0.0
    %79 = vmatprep.subr.mxu0 0.0
    %80 = vmatpush1.msra.mxu0 0.0
    %81 = vmatprep.subr.mxu0 0.0
    %82 = vmatpush1.msra.mxu0 0.0
    %83 = vmatprep.subr.mxu0 0.0
    %84 = vmatpush1.msra.mxu0 0.0
    %85 = vmatprep.subr.mxu0 0.0
    %86 = vmatpush1.msra.mxu0 0.0
    %87 = vmatprep.subr.mxu0 0.0
    %88 = vmatpush1.msra.mxu0 0.0
    %89 = vmatprep.subr.mxu0 0.0
    %90 = vmatpush1.msra.mxu0 0.0
    %91 = vmatprep.subr.mxu0 0.0
    %92 = vmatpush1.msra.mxu0 0.0
    %93 = vmatprep.subr.mxu0 0.0
    %94 = vmatpush1.msra.mxu0 %v57
    %95 = vmatprep.subr.mxu0 0.0
    %96 = vmatpush1.msra.mxu0 %v56
    %97 = vmatprep.subr.mxu0 0.0
    %98 = vmatpush1.msra.mxu0 %v55
    %99 = vmatprep.subr.mxu0 0.0
    %100 = vmatpush1.msra.mxu0 %v54
    %101 = vmatprep.subr.mxu0 0.0
    %102 = vmatpush2.msra.mxu0 0.0
    %103 = vmatprep.subr.mxu0 0.0
    %104 = vmatpush2.msra.mxu0 0.0
    %105 = vmatprep.subr.mxu0 0.0
    %106 = vmatpush2.msra.mxu0 0.0
    %107 = vmatprep.subr.mxu0 0.0
    %108 = vmatpush2.msra.mxu0 0.0
    %109 = vmatprep.subr.mxu0 0.0
    %110 = vmatpush2.msra.mxu0 0.0
    %111 = vmatprep.subr.mxu0 0.0
    %112 = vmatpush2.msra.mxu0 0.0
    %113 = vmatprep.subr.mxu0 0.0
    %114 = vmatpush2.msra.mxu0 0.0
    %115 = vmatprep.subr.mxu0 0.0
    %116 = vmatpush2.msra.mxu0 0.0
    %117 = vmatprep.subr.mxu0 0.0
    %118 = vmatpush2.msra.mxu0 0.0
    %119 = vmatprep.subr.mxu0 0.0
    %120 = vmatpush2.msra.mxu0 0.0
    %121 = vmatprep.subr.mxu0 0.0
    %122 = vmatpush2.msra.mxu0 0.0
    %123 = vmatprep.subr.mxu0 0.0
    %124 = vmatpush2.msra.mxu0 0.0
    %125 = vmatprep.subr.mxu0 0.0
    %126 = vmatpush2.msra.mxu0 0.0
    %127 = vmatprep.subr.mxu0 0.0
    %128 = vmatpush2.msra.mxu0 0.0
    %129 = vmatprep.subr.mxu0 0.0
    %130 = vmatpush2.msra.mxu0 0.0
    %131 = vmatprep.subr.mxu0 0.0
    %132 = vmatpush2.msra.mxu0 0.0
    %133 = vmatprep.mubr.f32.mxu0 0.0
    %134 = vmatmul.mubr.f32.gmra.mxu0 %v67
    %v135 = vpop.f32.mrf.mxu0
    %v136 = vadd.f32 %v63, %v135
    %v137 = vpop.f32.mrf.mxu0
    %138 = vdwg.mxu0
    %v139 = vmax.f32 %v136, 0.0
    %v140 = vld [vmem:[%s3] sm:$0xff]
    %v141 = vld [vmem:[%s3 + $0x8] sm:$0xff]
    %v142 = vld [vmem:[%s3 + $0x10] sm:$0xff]
    %v143 = vld [vmem:[%s3 + $0x18] sm:$0xff]
    %v144 = vld [vmem:[%s3 + $0x20] sm:$0xff]
    %v145 = vld [vmem:[%s3 + $0x28] sm:$0xff]
    %v146 = vld [vmem:[%s3 + $0x30] sm:$0xff]
    %v147 = vld [vmem:[%s3 + $0x38] sm:$0xff]
    %v148 = vld [vmem:[%s3 + $0x40] sm:$0xff]
    %v149 = vld [vmem:[%s3 + $0x48] sm:$0xff]
    %v150 = vld [vmem:[%s3 + $0x50] sm:$0xff]
    %v151 = vld [vmem:[%s3 + $0x58] sm:$0xff]
    %v152 = vld [vmem:[%s3 + $0x60] sm:$0xff]
    %v153 = vld [vmem:[%s3 + $0x68] sm:$0xff]
    %v154 = vld [vmem:[%s3 + $0x70] sm:$0xff]
    %v155 = vld [vmem:[%s3 + $0x78] sm:$0xff]
    %v156 = vld [vmem:[#allocation5] sm:$0x1]
    %v158 = vlaneseq
    %v159 = vshrl.u32 %v158, 7
    %v160 = vsub.s32 0, %v159
    %v161 = vrot.slane %v156, %v160
    %163 = vmatprep.subr.mxu0 0.0
    %164 = vmatpush1.msra.mxu0 %v155
    %165 = vmatprep.subr.mxu0 0.0
    %166 = vmatpush1.msra.mxu0 %v154
    %167 = vmatprep.subr.mxu0 0.0
    %168 = vmatpush1.msra.mxu0 %v153
    %169 = vmatprep.subr.mxu0 0.0
    %170 = vmatpush1.msra.mxu0 %v152
    %171 = vmatprep.subr.mxu0 0.0
    %172 = vmatpush1.msra.mxu0 %v151
    %173 = vmatprep.subr.mxu0 0.0
    %174 = vmatpush1.msra.mxu0 %v150
    %175 = vmatprep.subr.mxu0 0.0
    %176 = vmatpush1.msra.mxu0 %v149
    %177 = vmatprep.subr.mxu0 0.0
    %178 = vmatpush1.msra.mxu0 %v148
    %179 = vmatprep.subr.mxu0 0.0
    %180 = vmatpush1.msra.mxu0 %v147
    %181 = vmatprep.subr.mxu0 0.0
    %182 = vmatpush1.msra.mxu0 %v146
    %183 = vmatprep.subr.mxu0 0.0
    %184 = vmatpush1.msra.mxu0 %v145
    %185 = vmatprep.subr.mxu0 0.0
    %186 = vmatpush1.msra.mxu0 %v144
    %187 = vmatprep.subr.mxu0 0.0
    %188 = vmatpush1.msra.mxu0 %v143
    %189 = vmatprep.subr.mxu0 0.0
    %190 = vmatpush1.msra.mxu0 %v142
    %191 = vmatprep.subr.mxu0 0.0
    %192 = vmatpush1.msra.mxu0 %v141
    %193 = vmatprep.subr.mxu0 0.0
    %194 = vmatpush1.msra.mxu0 %v140
    %195 = vmatprep.subr.mxu0 0.0
    %196 = vmatpush2.msra.mxu0 0.0
    %197 = vmatprep.subr.mxu0 0.0
    %198 = vmatpush2.msra.mxu0 0.0
    %199 = vmatprep.subr.mxu0 0.0
    %200 = vmatpush2.msra.mxu0 0.0
    %201 = vmatprep.subr.mxu0 0.0
    %202 = vmatpush2.msra.mxu0 0.0
    %203 = vmatprep.subr.mxu0 0.0
    %204 = vmatpush2.msra.mxu0 0.0
    %205 = vmatprep.subr.mxu0 0.0
    %206 = vmatpush2.msra.mxu0 0.0
    %207 = vmatprep.subr.mxu0 0.0
    %208 = vmatpush2.msra.mxu0 0.0
    %209 = vmatprep.subr.mxu0 0.0
    %210 = vmatpush2.msra.mxu0 0.0
    %211 = vmatprep.subr.mxu0 0.0
    %212 = vmatpush2.msra.mxu0 0.0
    %213 = vmatprep.subr.mxu0 0.0
    %214 = vmatpush2.msra.mxu0 0.0
    %215 = vmatprep.subr.mxu0 0.0
    %216 = vmatpush2.msra.mxu0 0.0
    %217 = vmatprep.subr.mxu0 0.0
    %218 = vmatpush2.msra.mxu0 0.0
    %219 = vmatprep.subr.mxu0 0.0
    %220 = vmatpush2.msra.mxu0 0.0
    %221 = vmatprep.subr.mxu0 0.0
    %222 = vmatpush2.msra.mxu0 0.0
    %223 = vmatprep.subr.mxu0 0.0
    %224 = vmatpush2.msra.mxu0 0.0
    %225 = vmatprep.subr.mxu0 0.0
    %226 = vmatpush2.msra.mxu0 0.0
    %227 = vmatprep.mubr.f32.mxu0 0.0
    %228 = vmatmul.mubr.f32.gmra.mxu0 %v139
    %v229 = vpop.f32.mrf.mxu0
    %v230 = vadd.f32 %v161, %v229
    %v231 = vpop.f32.mrf.mxu0
    %232 = vdwg.mxu0
    %v233 = vmax.f32 %v230, 0.0
    %v234 = vld [vmem:[%s5] sm:$0xff]
    %v235 = vld [vmem:[%s5 + $0x8] sm:$0xff]
    %v236 = vld [vmem:[%s5 + $0x10] sm:$0xff]
    %v237 = vld [vmem:[%s5 + $0x18] sm:$0xff]
    %v238 = vld [vmem:[%s5 + $0x20] sm:$0xff]
    %v239 = vld [vmem:[%s5 + $0x28] sm:$0xff]
    %v240 = vld [vmem:[%s5 + $0x30] sm:$0xff]
    %v241 = vld [vmem:[%s5 + $0x38] sm:$0xff]
    %v242 = vld [vmem:[%s5 + $0x40] sm:$0xff]
    %v243 = vld [vmem:[%s5 + $0x48] sm:$0xff]
    %v244 = vld [vmem:[%s5 + $0x50] sm:$0xff]
    %v245 = vld [vmem:[%s5 + $0x58] sm:$0xff]
    %v246 = vld [vmem:[%s5 + $0x60] sm:$0xff]
    %v247 = vld [vmem:[%s5 + $0x68] sm:$0xff]
    %v248 = vld [vmem:[%s5 + $0x70] sm:$0xff]
    %v249 = vld [vmem:[%s5 + $0x78] sm:$0xff]
    %v250 = vld [vmem:[%s6] sm:$0x1]
    %v252 = vlaneseq
    %v253 = vshrl.u32 %v252, 7
    %v254 = vsub.s32 0, %v253
    %v255 = vrot.slane %v250, %v254
    %257 = vmatprep.subr.mxu0 0.0
    %258 = vmatpush1.msra.mxu0 %v249
    %259 = vmatprep.subr.mxu0 0.0
    %260 = vmatpush1.msra.mxu0 %v248
    %261 = vmatprep.subr.mxu0 0.0
    %262 = vmatpush1.msra.mxu0 %v247
    %263 = vmatprep.subr.mxu0 0.0
    %264 = vmatpush1.msra.mxu0 %v246
    %265 = vmatprep.subr.mxu0 0.0
    %266 = vmatpush1.msra.mxu0 %v245
    %267 = vmatprep.subr.mxu0 0.0
    %268 = vmatpush1.msra.mxu0 %v244
    %269 = vmatprep.subr.mxu0 0.0
    %270 = vmatpush1.msra.mxu0 %v243
    %271 = vmatprep.subr.mxu0 0.0
    %272 = vmatpush1.msra.mxu0 %v242
    %273 = vmatprep.subr.mxu0 0.0
    %274 = vmatpush1.msra.mxu0 %v241
    %275 = vmatprep.subr.mxu0 0.0
    %276 = vmatpush1.msra.mxu0 %v240
    %277 = vmatprep.subr.mxu0 0.0
    %278 = vmatpush1.msra.mxu0 %v239
    %279 = vmatprep.subr.mxu0 0.0
    %280 = vmatpush1.msra.mxu0 %v238
    %281 = vmatprep.subr.mxu0 0.0
    %282 = vmatpush1.msra.mxu0 %v237
    %283 = vmatprep.subr.mxu0 0.0
    %284 = vmatpush1.msra.mxu0 %v236
    %285 = vmatprep.subr.mxu0 0.0
    %286 = vmatpush1.msra.mxu0 %v235
    %287 = vmatprep.subr.mxu0 0.0
    %288 = vmatpush1.msra.mxu0 %v234
    %289 = vmatprep.subr.mxu0 0.0
    %290 = vmatpush2.msra.mxu0 0.0
    %291 = vmatprep.subr.mxu0 0.0
    %292 = vmatpush2.msra.mxu0 0.0
    %293 = vmatprep.subr.mxu0 0.0
    %294 = vmatpush2.msra.mxu0 0.0
    %295 = vmatprep.subr.mxu0 0.0
    %296 = vmatpush2.msra.mxu0 0.0
    %297 = vmatprep.subr.mxu0 0.0
    %298 = vmatpush2.msra.mxu0 0.0
    %299 = vmatprep.subr.mxu0 0.0
    %300 = vmatpush2.msra.mxu0 0.0
    %301 = vmatprep.subr.mxu0 0.0
    %302 = vmatpush2.msra.mxu0 0.0
    %303 = vmatprep.subr.mxu0 0.0
    %304 = vmatpush2.msra.mxu0 0.0
    %305 = vmatprep.subr.mxu0 0.0
    %306 = vmatpush2.msra.mxu0 0.0
    %307 = vmatprep.subr.mxu0 0.0
    %308 = vmatpush2.msra.mxu0 0.0
    %309 = vmatprep.subr.mxu0 0.0
    %310 = vmatpush2.msra.mxu0 0.0
    %311 = vmatprep.subr.mxu0 0.0
    %312 = vmatpush2.msra.mxu0 0.0
    %313 = vmatprep.subr.mxu0 0.0
    %314 = vmatpush2.msra.mxu0 0.0
    %315 = vmatprep.subr.mxu0 0.0
    %316 = vmatpush2.msra.mxu0 0.0
    %317 = vmatprep.subr.mxu0 0.0
    %318 = vmatpush2.msra.mxu0 0.0
    %319 = vmatprep.subr.mxu0 0.0
    %320 = vmatpush2.msra.mxu0 0.0
    %321 = vmatprep.mubr.f32.mxu0 0.0
    %322 = vmatmul.mubr.f32.gmra.mxu0 %v233
    %v323 = vpop.f32.mrf.mxu0
    %v324 = vadd.f32 %v255, %v323
    %v325 = vpop.f32.mrf.mxu0
    %326 = vdwg.mxu0
    %vm327 = vcmask 64512
    %v328 = vsel %vm327, %v324, -inf
    %329 = vmax.xlane.f32.xlu0 %v328
    %v330 = vpop.xlane.xlu0 %329
    %v331 = vsub.f32 %v324, %v330
    %v332 = vmul.f32 %v331, 1.442695
    %v333 = vpow.pop %v332
    %v334 = vsel %vm327, %v333, 0.0
    %335 = vadd.xlane.f32.xlu0 %v334
    %v336 = vpop.xlane.xlu0 %335
    %v337 = vrcp.pop %v336
    %v338 = vmul.f32 %v333, %v337
    %339 = vst.msk [vmem:[#allocation7] sm:$0xff] %vm327, %v338
    // Predicated region
    $region38: #{tpu_custom_call.1} parent=1 // pred_check
      _
    $region39: #{tpu_custom_call.1} parent=1 // pred_check_branch
      %341 = sbr.rel (0) target = $region41
    $region40: #{tpu_custom_call.1} parent=1 // pred_region
      %s343 = ssub.s32 128, 128
      %344 = vsyncadd [#allocation4], %s343
      %s346 = sshll.u32 [#allocation7], 4
      %s347 = int_to_ptr.vmem [resolvable:$true] %s346
      %349 = dma.vmem_to_hbm [thread:$0]  %s347, 128, %s7, [#allocation4]
    $region41: #{tpu_custom_call.1} parent=1 // pred_fallthru
      _
    // Predicated region
    $region42: #{tpu_custom_call.1} parent=1 // pred_check
      _
    $region43: #{tpu_custom_call.1} parent=1 // pred_check_branch
      %351 = sbr.rel (0) target = $region45
    $region44: #{tpu_custom_call.1} parent=1 // pred_region
      %352 = dma.done [#allocation4], 128
    $region45: #{tpu_custom_call.1} parent=1 // pred_fallthru
      _
    %353 = vsyncpa [#allocation3], 1
    %354 = vsyncpa [#allocation6], 1
    %355 = vsyncpa [#allocation4], 1

</llo_original>
